<compile_context>
chip_gen: v7x
topology: tpu7x:2x2x1
jax: 0.10.0
libtpu: 0.0.40
codegen_flags: <defaults>
</compile_context>

<pallas_src>
import functools

import jax
import jax.numpy as jnp
from jax.experimental import pallas as pl
from jax.experimental.pallas import tpu as pltpu


def _round_up(n, m):
    return ((n + m - 1) // m) * m


def _select_kernel(x_ref, w_ref, b_ref, o_ref, *, output_no):
    # In-kernel bf16 cast of the x tile (VPU cast hides under DMA/MXU slots);
    # W arrives pre-cast bf16, bias stays f32, accumulation is f32.
    x_bf = x_ref[...].astype(jnp.bfloat16)
    logits = jnp.dot(x_bf, w_ref[...],
                     preferred_element_type=jnp.float32) + b_ref[...]
    # Numerically stable softmax pieces, all f32 (v5e has no bf16 VPU/EUP).
    m = jnp.max(logits, axis=-1, keepdims=True)
    e = jnp.exp(logits - m)
    denom = jnp.sum(e, axis=-1, keepdims=True)
    # Select the column FIRST, then divide only the [TB, 1] slice.
    # (exact divide; pl.reciprocal(approx=True) would loosen the tolerance)
    sel = e[:, output_no:output_no + 1] / denom            # [TB, 1] f32
    # Lane-dense store: one [1, TB] row of the (1, B_pad) output slab.
    o_ref[...] = jnp.transpose(sel).astype(o_ref.dtype)


def output_selector(x, w, b, *, output_no, reduce=None, tile_b=None):
    """Fused logits -> softmax -> column-select Pallas kernel (+ wrapper reduce).

    x: [B, H] f32, w: [H, C] f32, b: [1, C] f32.
    Returns [B, 1] (reduce=None) or [1, 1] (reduce in {"sum", "mean"}), or
    whatever a user-supplied callable `reduce` returns on the [B, 1] slice.
    """
    B, H = x.shape
    Hw, C = w.shape
    assert H == Hw and b.shape == (1, C)

    # Batch tile: default 512 (mem-bound roofline ~85% at 512 vs ~29% at 128
    # on v6e; also fills the 256-row MXU on v6e/v7x). Small B rounds up to 16
    # (bf16 sublane pack). Multi-tile runs need TB % 128 == 0 for the
    # lane-dense (1, B_pad) output slab (unmasked vst).
    if tile_b is None:
        TB = min(512, _round_up(B, 16))
    else:
        TB = tile_b
    assert TB % 8 == 0
    NT = pl.cdiv(B, TB)
    B_pad = NT * TB
    if NT > 1:
        assert TB % 128 == 0, "lane-dense tiled output requires TB % 128 == 0"

    # W / b: tiny, VMEM-resident (constant index_map -> no re-DMA), so a
    # wrapper-side bf16 cast of W is free; the softmax bias stays f32.
    w_bf = w.astype(jnp.bfloat16)
    b_f32 = b.astype(jnp.float32)

    # Scoped-VMEM budget: x f32 block (<=3 buffers) + resident W/b + output
    # blocks, with ~50% headroom; clamp to [32 MiB, 64 MiB] (v7x physical).
    need = TB * H * 4 * 3 + H * C * 2 * 2 + C * 4 * 2 + TB * 4 * 2
    vmem_limit = min(64 << 20, max(32 << 20, int(need * 1.5)))

    cost = pl.CostEstimate(
        flops=2 * B_pad * H * C,
        transcendentals=B_pad * C,
        bytes_accessed=B * H * 4 + H * C * 2 + C * 4 + B_pad * 4,
    )

    kernel = functools.partial(_select_kernel, output_no=output_no)

    def attempt(use_buffered, pad_x):
        def spec(shape, index_map, bufs):
            if use_buffered and bufs is not None:
                return pl.BlockSpec(shape, index_map,
                                    pipeline_mode=pl.Buffered(bufs))
            return pl.BlockSpec(shape, index_map)

        in_specs = [
            # x: deepen the pipeline when there are enough grid steps.
            spec((TB, H), lambda i: (i, 0), min(3, max(2, NT))),
            # W / b: resident (constant index_map) -> single-buffered.
            spec((H, C), lambda i: (0, 0), 1),
            spec((1, C), lambda i: (0, 0), 1),
        ]
        xx = x
        if pad_x and B_pad != B:
            xx = jnp.pad(x, ((0, B_pad - B), (0, 0)))
        return pl.pallas_call(
            kernel,
            out_shape=jax.ShapeDtypeStruct((1, B_pad), jnp.float32),
            grid_spec=pltpu.PrefetchScalarGridSpec(
                num_scalar_prefetch=0,
                grid=(NT,),
                in_specs=in_specs,
                out_specs=pl.BlockSpec((1, TB), lambda i: (0, i)),
            ),
            compiler_params=pltpu.CompilerParams(
                dimension_semantics=("parallel",),
                vmem_limit_bytes=vmem_limit),
            cost_estimate=cost,
        )(xx, w_bf, b_f32)

    # Capability fallback chain:
    #   1) no x pad + Buffered pipeline hints   (fast path)
    #   2) no x pad + default double buffering
    #   3) padded x + default double buffering  (previous known-good config)
    out = None
    last_err = None
    for use_buffered, pad_x in ((True, False), (False, False), (False, True)):
        try:
            out = attempt(use_buffered, pad_x)
            break
        except Exception as e:  # lowering / unsupported-feature errors only
            last_err = e
    if out is None:
        raise last_err

    # Drop out-of-bounds / padded lanes, restore [B, 1].
    sel = out[0, :B].reshape(B, 1)

    if reduce is None:
        return sel
    if reduce == "sum":
        return jnp.sum(sel).reshape(1, 1)
    if reduce == "mean":
        return jnp.mean(sel).reshape(1, 1)
    if callable(reduce):
        return reduce(sel)
    raise ValueError(f"unsupported reduce: {reduce}")


def _reference(x, w, b, output_no, reduce=None):
    # Mirrors the kernel's bf16 MXU operands (f32 accumulation) so the
    # comparison tolerance stays tight.
    logits = jnp.dot(x.astype(jnp.bfloat16), w.astype(jnp.bfloat16),
                     preferred_element_type=jnp.float32) + b
    probs = jax.nn.softmax(logits, axis=-1)
    f = probs[:, output_no:output_no + 1]
    if reduce == "sum":
        f = jnp.sum(f, keepdims=True)
    elif reduce == "mean":
        f = jnp.mean(f, keepdims=True)
    return f


if __name__ == "__main__":
    key = jax.random.PRNGKey(0)
    kx, kw, kb, kx2, kx3 = jax.random.split(key, 5)

    B, H, C = 8, 32, 16           # batch, hidden, num classes
    output_no = 3                 # which class probability to select

    x = jax.random.normal(kx, (B, H), dtype=jnp.float32)
    w = jax.random.normal(kw, (H, C), dtype=jnp.float32) * 0.1
    b = jax.random.normal(kb, (1, C), dtype=jnp.float32) * 0.1

    # reduce=None (default OutputSelector behavior): [B, 1] selected probs.
    out = output_selector(x, w, b, output_no=output_no, reduce=None)
    jax.block_until_ready(out)
    ref = _reference(x, w, b, output_no, reduce=None)
    assert out.shape == (B, 1)
    assert jnp.allclose(out, ref, atol=1e-5, rtol=1e-4)

    # reduce="sum": [1, 1].
    out_s = output_selector(x, w, b, output_no=output_no, reduce="sum")
    jax.block_until_ready(out_s)
    ref_s = _reference(x, w, b, output_no, reduce="sum")
    assert out_s.shape == (1, 1)
    assert jnp.allclose(out_s, ref_s, atol=1e-5, rtol=1e-4)

    # Callable reduce (mirrors the PyTorch module's arbitrary `reduce`).
    out_c = output_selector(x, w, b, output_no=output_no,
                            reduce=lambda f: jnp.sum(f, axis=0, keepdims=True))
    jax.block_until_ready(out_c)
    assert out_c.shape == (1, 1)
    assert jnp.allclose(out_c, ref_s, atol=1e-5, rtol=1e-4)

    # Non-multiple batch (B=20): single tile with out-of-bounds tail rows.
    B2 = 20
    x2 = jax.random.normal(kx2, (B2, H), dtype=jnp.float32)
    out2 = output_selector(x2, w, b, output_no=output_no, reduce=None)
    jax.block_until_ready(out2)
    ref2 = _reference(x2, w, b, output_no, reduce=None)
    assert out2.shape == (B2, 1)
    assert jnp.allclose(out2, ref2, atol=1e-5, rtol=1e-4)

    # Multi-tile path: 2 batch tiles of 128, 56 out-of-bounds tail rows.
    B3 = 200
    x3 = jax.random.normal(kx3, (B3, H), dtype=jnp.float32)
    out3 = output_selector(x3, w, b, output_no=output_no, reduce=None,
                           tile_b=128)
    jax.block_until_ready(out3)
    ref3 = _reference(x3, w, b, output_no, reduce=None)
    assert out3.shape == (B3, 1)
    assert jnp.allclose(out3, ref3, atol=1e-5, rtol=1e-4)

    out3m = output_selector(x3, w, b, output_no=output_no, reduce="mean",
                            tile_b=128)
    jax.block_until_ready(out3m)
    ref3m = _reference(x3, w, b, output_no, reduce="mean")
    assert out3m.shape == (1, 1)
    assert jnp.allclose(out3m, ref3m, atol=1e-5, rtol=1e-4)

    print("KERNEL_OK")
</pallas_src>

<mosaic_0001>
module attributes {stable_mosaic.version = 11 : i64} {
  func.func @_select_kernel(%arg0: i32, %arg1: memref<16x32xf32, #tpu.memory_space<vmem>>, %arg2: memref<32x16xbf16, #tpu.memory_space<vmem>>, %arg3: memref<1x16xf32, #tpu.memory_space<vmem>>, %arg4: memref<1x16xf32, #tpu.memory_space<vmem>>) attributes {dimension_semantics = [#tpu.dimension_semantics<parallel>], iteration_bounds = array<i64: 1>, scalar_prefetch = 0 : i64, scratch_operands = 0 : i64, tpu.core_type = #tpu.core_type<tc>, window_params = [{pipeline_mode = #tpu.pipeline_mode<double_buffered>, transform_indices = @transform_0, window_bounds = array<i64: 16, 32>}, {pipeline_mode = #tpu.pipeline_mode<synchronous>, transform_indices = @transform_1, window_bounds = array<i64: 32, 16>}, {pipeline_mode = #tpu.pipeline_mode<synchronous>, transform_indices = @transform_2, window_bounds = array<i64: 1, 16>}, {transform_indices = @transform_3, window_bounds = array<i64: 1, 16>}]} {
    %c0 = arith.constant 0 : index
    %c0_0 = arith.constant 0 : index
    %0 = vector.load %arg1[%c0, %c0_0] : memref<16x32xf32, #tpu.memory_space<vmem>>, vector<16x32xf32>
    %1 = arith.truncf %0 : vector<16x32xf32> to vector<16x32xbf16>
    %c0_1 = arith.constant 0 : index
    %c0_2 = arith.constant 0 : index
    %2 = vector.load %arg2[%c0_1, %c0_2] : memref<32x16xbf16, #tpu.memory_space<vmem>>, vector<32x16xbf16>
    %cst = arith.constant dense<0.000000e+00> : vector<16x16xf32>
    %3 = tpu.matmul %1, %2, %cst {dimension_numbers = #tpu.dot_dimension_numbers<[1], [0], [0], [1], [0, 0, 1, 1], [], []>} : vector<16x32xbf16>, vector<32x16xbf16>, vector<16x16xf32> -> vector<16x16xf32>
    %c0_3 = arith.constant 0 : index
    %c0_4 = arith.constant 0 : index
    %4 = vector.load %arg3[%c0_3, %c0_4] : memref<1x16xf32, #tpu.memory_space<vmem>>, vector<1x16xf32>
    %5 = vector.broadcast %4 : vector<1x16xf32> to vector<16x16xf32>
    %6 = arith.addf %3, %5 : vector<16x16xf32>
    %cst_5 = arith.constant dense<0xFF800000> : vector<16xf32>
    %7 = vector.multi_reduction <maximumf>, %6, %cst_5 [1] : vector<16x16xf32> to vector<16xf32>
    %8 = vector.shape_cast %7 : vector<16xf32> to vector<16x1xf32>
    %9 = vector.broadcast %8 : vector<16x1xf32> to vector<16x16xf32>
    %10 = arith.subf %6, %9 : vector<16x16xf32>
    %11 = math.exp %10 : vector<16x16xf32>
    %cst_6 = arith.constant dense<0.000000e+00> : vector<16xf32>
    %12 = vector.multi_reduction <add>, %11, %cst_6 [1] : vector<16x16xf32> to vector<16xf32>
    %13 = vector.shape_cast %12 : vector<16xf32> to vector<16x1xf32>
    %14 = vector.extract_strided_slice %11 {offsets = [0, 3], sizes = [16, 1], strides = [1, 1]} : vector<16x16xf32> to vector<16x1xf32>
    %15 = arith.divf %14, %13 : vector<16x1xf32>
    %16 = tpu.transpose %15, [1, 0] : vector<16x1xf32> -> vector<1x16xf32>
    %c0_7 = arith.constant 0 : index
    %c0_8 = arith.constant 0 : index
    %17 = vector.load %arg4[%c0_7, %c0_8] : memref<1x16xf32, #tpu.memory_space<vmem>>, vector<1x16xf32>
    tpu.vector_store %arg4[%c0_7, %c0_8], %16 {strides = array<i32>} : memref<1x16xf32, #tpu.memory_space<vmem>>, vector<1x16xf32>,
    return
  }
  func.func @transform_0(%arg0: i32) -> (i32, i32) {
    %c0_i32 = arith.constant 0 : i32
    %c0_i32_0 = arith.constant 0 : i32
    return %arg0, %c0_i32 : i32, i32
  }
  func.func @transform_1(%arg0: i32) -> (i32, i32) {
    %c0_i32 = arith.constant 0 : i32
    %c0_i32_0 = arith.constant 0 : i32
    %c0_i32_1 = arith.constant 0 : i32
    return %c0_i32, %c0_i32_0 : i32, i32
  }
  func.func @transform_2(%arg0: i32) -> (i32, i32) {
    %c0_i32 = arith.constant 0 : i32
    %c0_i32_0 = arith.constant 0 : i32
    %c0_i32_1 = arith.constant 0 : i32
    return %c0_i32, %c0_i32_0 : i32, i32
  }
  func.func @transform_3(%arg0: i32) -> (i32, i32) {
    %c0_i32 = arith.constant 0 : i32
    %c0_i32_0 = arith.constant 0 : i32
    return %c0_i32, %arg0 : i32, i32
  }
}

module attributes {stable_mosaic.version = 11 : i64} {
  func.func @_select_kernel(%arg0: i32, %arg1: memref<16x32xf32, #tpu.memory_space<vmem>>, %arg2: memref<32x16xbf16, #tpu.memory_space<vmem>>, %arg3: memref<1x16xf32, #tpu.memory_space<vmem>>, %arg4: memref<1x16xf32, #tpu.memory_space<vmem>>) attributes {dimension_semantics = [#tpu.dimension_semantics<parallel>], iteration_bounds = array<i64: 1>, scalar_prefetch = 0 : i64, scratch_operands = 0 : i64, tpu.core_type = #tpu.core_type<tc>, window_params = [{transform_indices = @transform_0, window_bounds = array<i64: 16, 32>}, {pipeline_mode = #tpu.pipeline_mode<synchronous>, transform_indices = @transform_1, window_bounds = array<i64: 32, 16>}, {pipeline_mode = #tpu.pipeline_mode<synchronous>, transform_indices = @transform_2, window_bounds = array<i64: 1, 16>}, {transform_indices = @transform_3, window_bounds = array<i64: 1, 16>}]} {
    %c0 = arith.constant 0 : index
    %c0_0 = arith.constant 0 : index
    %0 = vector.load %arg1[%c0, %c0_0] : memref<16x32xf32, #tpu.memory_space<vmem>>, vector<16x32xf32>
    %1 = arith.truncf %0 : vector<16x32xf32> to vector<16x32xbf16>
    %c0_1 = arith.constant 0 : index
    %c0_2 = arith.constant 0 : index
    %2 = vector.load %arg2[%c0_1, %c0_2] : memref<32x16xbf16, #tpu.memory_space<vmem>>, vector<32x16xbf16>
    %cst = arith.constant dense<0.000000e+00> : vector<16x16xf32>
    %3 = tpu.matmul %1, %2, %cst {dimension_numbers = #tpu.dot_dimension_numbers<[1], [0], [0], [1], [0, 0, 1, 1], [], []>} : vector<16x32xbf16>, vector<32x16xbf16>, vector<16x16xf32> -> vector<16x16xf32>
    %c0_3 = arith.constant 0 : index
    %c0_4 = arith.constant 0 : index
    %4 = vector.load %arg3[%c0_3, %c0_4] : memref<1x16xf32, #tpu.memory_space<vmem>>, vector<1x16xf32>
    %5 = vector.broadcast %4 : vector<1x16xf32> to vector<16x16xf32>
    %6 = arith.addf %3, %5 : vector<16x16xf32>
    %cst_5 = arith.constant dense<0xFF800000> : vector<16xf32>
    %7 = vector.multi_reduction <maximumf>, %6, %cst_5 [1] : vector<16x16xf32> to vector<16xf32>
    %8 = vector.shape_cast %7 : vector<16xf32> to vector<16x1xf32>
    %9 = vector.broadcast %8 : vector<16x1xf32> to vector<16x16xf32>
    %10 = arith.subf %6, %9 : vector<16x16xf32>
    %11 = math.exp %10 : vector<16x16xf32>
    %cst_6 = arith.constant dense<0.000000e+00> : vector<16xf32>
    %12 = vector.multi_reduction <add>, %11, %cst_6 [1] : vector<16x16xf32> to vector<16xf32>
    %13 = vector.shape_cast %12 : vector<16xf32> to vector<16x1xf32>
    %14 = vector.extract_strided_slice %11 {offsets = [0, 3], sizes = [16, 1], strides = [1, 1]} : vector<16x16xf32> to vector<16x1xf32>
    %15 = arith.divf %14, %13 : vector<16x1xf32>
    %16 = tpu.transpose %15, [1, 0] : vector<16x1xf32> -> vector<1x16xf32>
    %c0_7 = arith.constant 0 : index
    %c0_8 = arith.constant 0 : index
    %17 = vector.load %arg4[%c0_7, %c0_8] : memref<1x16xf32, #tpu.memory_space<vmem>>, vector<1x16xf32>
    tpu.vector_store %arg4[%c0_7, %c0_8], %16 {strides = array<i32>} : memref<1x16xf32, #tpu.memory_space<vmem>>, vector<1x16xf32>,
    return
  }
  func.func @transform_0(%arg0: i32) -> (i32, i32) {
    %c0_i32 = arith.constant 0 : i32
    %c0_i32_0 = arith.constant 0 : i32
    return %arg0, %c0_i32 : i32, i32
  }
  func.func @transform_1(%arg0: i32) -> (i32, i32) {
    %c0_i32 = arith.constant 0 : i32
    %c0_i32_0 = arith.constant 0 : i32
    %c0_i32_1 = arith.constant 0 : i32
    return %c0_i32, %c0_i32_0 : i32, i32
  }
  func.func @transform_2(%arg0: i32) -> (i32, i32) {
    %c0_i32 = arith.constant 0 : i32
    %c0_i32_0 = arith.constant 0 : i32
    %c0_i32_1 = arith.constant 0 : i32
    return %c0_i32, %c0_i32_0 : i32, i32
  }
  func.func @transform_3(%arg0: i32) -> (i32, i32) {
    %c0_i32 = arith.constant 0 : i32
    %c0_i32_0 = arith.constant 0 : i32
    return %c0_i32, %arg0 : i32, i32
  }
}

module attributes {stable_mosaic.version = 11 : i64} {
  func.func @_select_kernel(%arg0: i32, %arg1: memref<16x32xf32, #tpu.memory_space<vmem>>, %arg2: memref<32x16xbf16, #tpu.memory_space<vmem>>, %arg3: memref<1x16xf32, #tpu.memory_space<vmem>>, %arg4: memref<1x16xf32, #tpu.memory_space<vmem>>) attributes {dimension_semantics = [#tpu.dimension_semantics<parallel>], iteration_bounds = array<i64: 1>, scalar_prefetch = 0 : i64, scratch_operands = 0 : i64, tpu.core_type = #tpu.core_type<tc>, window_params = [{transform_indices = @transform_0, window_bounds = array<i64: 16, 32>}, {pipeline_mode = #tpu.pipeline_mode<synchronous>, transform_indices = @transform_1, window_bounds = array<i64: 32, 16>}, {pipeline_mode = #tpu.pipeline_mode<synchronous>, transform_indices = @transform_2, window_bounds = array<i64: 1, 16>}, {transform_indices = @transform_3, window_bounds = array<i64: 1, 16>}]} {
    %c0 = arith.constant 0 : index
    %c0_0 = arith.constant 0 : index
    %0 = vector.load %arg1[%c0, %c0_0] : memref<16x32xf32, #tpu.memory_space<vmem>>, vector<16x32xf32>
    %1 = arith.truncf %0 : vector<16x32xf32> to vector<16x32xbf16>
    %c0_1 = arith.constant 0 : index
    %c0_2 = arith.constant 0 : index
    %2 = vector.load %arg2[%c0_1, %c0_2] : memref<32x16xbf16, #tpu.memory_space<vmem>>, vector<32x16xbf16>
    %cst = arith.constant dense<0.000000e+00> : vector<16x16xf32>
    %3 = tpu.matmul %1, %2, %cst {dimension_numbers = #tpu.dot_dimension_numbers<[1], [0], [0], [1], [0, 0, 1, 1], [], []>} : vector<16x32xbf16>, vector<32x16xbf16>, vector<16x16xf32> -> vector<16x16xf32>
    %c0_3 = arith.constant 0 : index
    %c0_4 = arith.constant 0 : index
    %4 = vector.load %arg3[%c0_3, %c0_4] : memref<1x16xf32, #tpu.memory_space<vmem>>, vector<1x16xf32>
    %5 = vector.broadcast %4 : vector<1x16xf32> to vector<16x16xf32>
    %6 = arith.addf %3, %5 : vector<16x16xf32>
    %cst_5 = arith.constant dense<0xFF800000> : vector<16xf32>
    %7 = vector.multi_reduction <maximumf>, %6, %cst_5 [1] : vector<16x16xf32> to vector<16xf32>
    %8 = vector.shape_cast %7 : vector<16xf32> to vector<16x1xf32>
    %9 = vector.broadcast %8 : vector<16x1xf32> to vector<16x16xf32>
    %10 = arith.subf %6, %9 : vector<16x16xf32>
    %11 = math.exp %10 : vector<16x16xf32>
    %cst_6 = arith.constant dense<0.000000e+00> : vector<16xf32>
    %12 = vector.multi_reduction <add>, %11, %cst_6 [1] : vector<16x16xf32> to vector<16xf32>
    %13 = vector.shape_cast %12 : vector<16xf32> to vector<16x1xf32>
    %14 = vector.extract_strided_slice %11 {offsets = [0, 3], sizes = [16, 1], strides = [1, 1]} : vector<16x16xf32> to vector<16x1xf32>
    %15 = arith.divf %14, %13 : vector<16x1xf32>
    %16 = tpu.transpose %15, [1, 0] : vector<16x1xf32> -> vector<1x16xf32>
    %c0_7 = arith.constant 0 : index
    %c0_8 = arith.constant 0 : index
    %17 = vector.load %arg4[%c0_7, %c0_8] : memref<1x16xf32, #tpu.memory_space<vmem>>, vector<1x16xf32>
    tpu.vector_store %arg4[%c0_7, %c0_8], %16 {strides = array<i32>} : memref<1x16xf32, #tpu.memory_space<vmem>>, vector<1x16xf32>,
    return
  }
  func.func @transform_0(%arg0: i32) -> (i32, i32) {
    %c0_i32 = arith.constant 0 : i32
    %c0_i32_0 = arith.constant 0 : i32
    return %arg0, %c0_i32 : i32, i32
  }
  func.func @transform_1(%arg0: i32) -> (i32, i32) {
    %c0_i32 = arith.constant 0 : i32
    %c0_i32_0 = arith.constant 0 : i32
    %c0_i32_1 = arith.constant 0 : i32
    return %c0_i32, %c0_i32_0 : i32, i32
  }
  func.func @transform_2(%arg0: i32) -> (i32, i32) {
    %c0_i32 = arith.constant 0 : i32
    %c0_i32_0 = arith.constant 0 : i32
    %c0_i32_1 = arith.constant 0 : i32
    return %c0_i32, %c0_i32_0 : i32, i32
  }
  func.func @transform_3(%arg0: i32) -> (i32, i32) {
    %c0_i32 = arith.constant 0 : i32
    %c0_i32_0 = arith.constant 0 : i32
    return %c0_i32, %arg0 : i32, i32
  }
}

</mosaic_0001>

<llo_original>
// kernel: tpu_custom_call.1
$region0: #{tpu_custom_call.1}
  #allocation0 [shape = 'u32[]', space=smem, size = 0x4, offset = 0x4, fixed_abs, tag = 'smem constant byte address 0x4 - core index']
  #allocation1 [shape = 'u32[144,128]{1,0:T(1,128)}', space=vmem, size = 0x12000, scoped, tag = 'internal scratch']
  %s0 = inlined_call_operand.vmem [shape: f32[8,32], index: 0, kind: input, shape index: {}]
  %s1 = inlined_call_operand.vmem [shape: bf16[32,16], index: 1, kind: input, shape index: {}]
  %s2 = inlined_call_operand.vmem [shape: f32[1,16], index: 2, kind: input, shape index: {}]
  %s3 = inlined_call_operand.hbm [shape: f32[1,16], index: 3, kind: output, shape index: {}]
  %s4 = sld [smem:[#allocation0]]
  $region22: #{tpu_custom_call.1} parent=0
    _
  %s6 = ssub.s32 1, %s4
  %s7 = scalar_select 0, %s6, %s4
  $region1: #{tpu_custom_call.1} parent=0
    #allocation2 [shape = 'u8[512]{0}', space=vmem, size = 0x400, scoped, tag = 'output window, operand 0, single buffered']
    #allocation3 [shape = 's32[1]{0}', space=sflag, size = 0x4, scoped, tag = 'scoped memory for tpu_custom_call.1']
    %8 = vsyncpa [#allocation3], 0
    // Predicated region
    $region2: #{tpu_custom_call.1} parent=1 // pred_check
      _
    $region3: #{tpu_custom_call.1} parent=1 // pred_check_branch
      %10 = sbr.rel (0) target = $region5
    $region4: #{tpu_custom_call.1} parent=1 // pred_region
      _
    $region5: #{tpu_custom_call.1} parent=1 // pred_fallthru
      _
    // Predicated region
    $region6: #{tpu_custom_call.1} parent=1 // pred_check
      _
    $region7: #{tpu_custom_call.1} parent=1 // pred_check_branch
      %12 = sbr.rel (0) target = $region9
    $region8: #{tpu_custom_call.1} parent=1 // pred_region
      _
    $region9: #{tpu_custom_call.1} parent=1 // pred_fallthru
      _
    // Predicated region
    $region10: #{tpu_custom_call.1} parent=1 // pred_check
      _
    $region11: #{tpu_custom_call.1} parent=1 // pred_check_branch
      %14 = sbr.rel (0) target = $region13
    $region12: #{tpu_custom_call.1} parent=1 // pred_region
      _
    $region13: #{tpu_custom_call.1} parent=1 // pred_fallthru
      _
    %v16 = vld [vmem:[%s0] sm:$0xff]
    %v17 = vld [vmem:[%s0 + $0x8] sm:$0xff]
    %v18 = vpack.c.bf16 %v17, %v16
    %v19 = vld [vmem:[%s1] sm:$0xf]
    %v20 = vld [vmem:[%s1 + $0x4] sm:$0xf]
    %v21 = vld [vmem:[%s1 + $0x8] sm:$0xf]
    %v22 = vld [vmem:[%s1 + $0xc] sm:$0xf]
    %v23 = vld [vmem:[%s2] sm:$0x1]
    %v25 = vlaneseq
    %v26 = vshrl.u32 %v25, 7
    %v27 = vsub.s32 0, %v26
    %v28 = vrot.slane %v23, %v27
    %v34 = vunpack.c.l.b16 %v19
    %v35 = vunpack.c.l.b16 %v20
    %v36 = vunpack.c.l.b16 %v21
    %v37 = vunpack.c.l.b16 %v22
    %v38 = vpack.c.b16 %v35, %v34
    %v39 = vpack.c.b16 %v37, %v36
    %vm42 = vcmask 261120
    %v44 = vsel %vm42, %v18, 0
    %46 = vmatprep.subr.bf16.mxu0 0
    %47 = vmatpush1.bf16.msra.mxu0 %v38
    %48 = vmatprep.subr.bf16.mxu0 0
    %49 = vmatpush1.bf16.msra.mxu0 %v39
    %50 = vmatprep.subr.bf16.mxu0 0
    %51 = vmatpush1.bf16.msra.mxu0 0
    %52 = vmatprep.subr.bf16.mxu0 0
    %53 = vmatpush1.bf16.msra.mxu0 0
    %54 = vmatprep.subr.bf16.mxu0 0
    %55 = vmatpush1.bf16.msra.mxu0 0
    %56 = vmatprep.subr.bf16.mxu0 0
    %57 = vmatpush1.bf16.msra.mxu0 0
    %58 = vmatprep.subr.bf16.mxu0 0
    %59 = vmatpush1.bf16.msra.mxu0 0
    %60 = vmatprep.subr.bf16.mxu0 0
    %61 = vmatpush1.bf16.msra.mxu0 0
    %62 = vmatprep.subr.bf16.mxu0 0
    %63 = vmatpush1.bf16.msra.mxu0 0
    %64 = vmatprep.subr.bf16.mxu0 0
    %65 = vmatpush1.bf16.msra.mxu0 0
    %66 = vmatprep.subr.bf16.mxu0 0
    %67 = vmatpush1.bf16.msra.mxu0 0
    %68 = vmatprep.subr.bf16.mxu0 0
    %69 = vmatpush1.bf16.msra.mxu0 0
    %70 = vmatprep.subr.bf16.mxu0 0
    %71 = vmatpush1.bf16.msra.mxu0 0
    %72 = vmatprep.subr.bf16.mxu0 0
    %73 = vmatpush1.bf16.msra.mxu0 0
    %74 = vmatprep.subr.bf16.mxu0 0
    %75 = vmatpush1.bf16.msra.mxu0 0
    %76 = vmatprep.subr.bf16.mxu0 0
    %77 = vmatpush1.bf16.msra.mxu0 0
    %78 = vmatprep.mubr.bf16.mxu0 0
    %79 = vmatmul.mubr.bf16.gmra.mrb[0].mxu0 %v44
    %v80 = vpop.f32.mrb[0].mxu0
    %v81 = vadd.f32 %v28, %v80
    %v82 = vpop.f32.mrb[0].mxu0
    %v83 = vpop.f32.mrb[0].mxu0
    %v84 = vadd.f32 %v28, %v83
    %v85 = vpop.f32.mrb[0].mxu0
    %86 = vdwg.mxu0
    %vm87 = vcmask 130048
    %v88 = vsel %vm87, %v81, -inf
    %89 = vmax.xlane.f32.xlu0 %v88
    %v90 = vpop.xlane.xlu0 %89
    %v91 = vsel %vm87, %v84, -inf
    %92 = vmax.xlane.f32.xlu0 %v91
    %v93 = vpop.xlane.xlu0 %92
    %v94 = vsub.f32 %v81, %v90
    %v95 = vsub.f32 %v84, %v93
    %v96 = vmul.f32 %v94, 1.442695
    %v97 = vpow.pop %v96
    %v98 = vmul.f32 %v95, 1.442695
    %v99 = vpow.pop %v98
    %v100 = vsel %vm87, %v97, 0.0
    %101 = vadd.xlane.f32.xlu0 %v100
    %v102 = vpop.xlane.xlu0 %101
    %v103 = vsel %vm87, %v99, 0.0
    %104 = vadd.xlane.f32.xlu0 %v103
    %v105 = vpop.xlane.xlu0 %104
    %v106 = vrcp.pop %v102
    %v107 = vmul.f32 %v97, %v106
    %v108 = vrcp.pop %v105
    %v109 = vmul.f32 %v99, %v108
    %112 = vrot.lane.b32.xlu0 %v107, 125
    %v113 = vpop.permute.xlu0 %112
    %114 = vrot.lane.b32.xlu0 %v109, 125
    %v115 = vpop.permute.xlu0 %114
    %118 = vxpose.xlu0.b32.start [1/16] %v113, 128
    %119 = vxpose.xlu0.b32.cont [2/16] %v115, 128
    %120 = vxpose.xlu0.b32.cont [3/16] 0.0, 128
    %121 = vxpose.xlu0.b32.cont [4/16] 0.0, 128
    %122 = vxpose.xlu0.b32.cont [5/16] 0.0, 128
    %123 = vxpose.xlu0.b32.cont [6/16] 0.0, 128
    %124 = vxpose.xlu0.b32.cont [7/16] 0.0, 128
    %125 = vxpose.xlu0.b32.cont [8/16] 0.0, 128
    %126 = vxpose.xlu0.b32.cont [9/16] 0.0, 128
    %127 = vxpose.xlu0.b32.cont [10/16] 0.0, 128
    %128 = vxpose.xlu0.b32.cont [11/16] 0.0, 128
    %129 = vxpose.xlu0.b32.cont [12/16] 0.0, 128
    %130 = vxpose.xlu0.b32.cont [13/16] 0.0, 128
    %131 = vxpose.xlu0.b32.cont [14/16] 0.0, 128
    %132 = vxpose.xlu0.b32.cont [15/16] 0.0, 128
    %133 = vxpose.xlu0.b32.end [16/16] 0.0, 128
    %v134 = vpop.trf.xlu0
    %v135 = vpop.trf.xlu0
    %v136 = vpop.trf.xlu0
    %v137 = vpop.trf.xlu0
    %v138 = vpop.trf.xlu0
    %v139 = vpop.trf.xlu0
    %v140 = vpop.trf.xlu0
    %v141 = vpop.trf.xlu0
    %v142 = vpop.trf.xlu0
    %v143 = vpop.trf.xlu0
    %v144 = vpop.trf.xlu0
    %v145 = vpop.trf.xlu0
    %v146 = vpop.trf.xlu0
    %v147 = vpop.trf.xlu0
    %v148 = vpop.trf.xlu0
    %v149 = vpop.trf.xlu0
    %vm150 = vcmask 122880
    %151 = vst.msk [vmem:[#allocation2] sm:$0x1] %vm150, %v134
    // Predicated region
    $region14: #{tpu_custom_call.1} parent=1 // pred_check
      _
    $region15: #{tpu_custom_call.1} parent=1 // pred_check_branch
      %153 = sbr.rel (0) target = $region17
    $region16: #{tpu_custom_call.1} parent=1 // pred_region
      %s155 = ssub.s32 16, 16
      %156 = vsyncadd [#allocation3], %s155
      %s158 = sshll.u32 [#allocation2], 4
      %s159 = int_to_ptr.vmem [resolvable:$true] %s158
      %161 = dma.vmem_to_hbm [thread:$0]  %s159, 16, %s3, [#allocation3]
    $region17: #{tpu_custom_call.1} parent=1 // pred_fallthru
      _
    // Predicated region
    $region18: #{tpu_custom_call.1} parent=1 // pred_check
      _
    $region19: #{tpu_custom_call.1} parent=1 // pred_check_branch
      %163 = sbr.rel (0) target = $region21
    $region20: #{tpu_custom_call.1} parent=1 // pred_region
      %164 = dma.done [#allocation3], 16
    $region21: #{tpu_custom_call.1} parent=1 // pred_fallthru
      _
    %165 = vsyncpa [#allocation3], 1

// kernel: tpu_custom_call.1
$region0: #{tpu_custom_call.1}
  #allocation0 [shape = 'u32[]', space=smem, size = 0x4, offset = 0x4, fixed_abs, tag = 'smem constant byte address 0x4 - core index']
  #allocation1 [shape = 'u32[144,128]{1,0:T(1,128)}', space=vmem, size = 0x12000, scoped, tag = 'internal scratch']
  %s0 = inlined_call_operand.vmem [shape: f32[8,32], index: 0, kind: input, shape index: {}]
  %s1 = inlined_call_operand.vmem [shape: bf16[32,16], index: 1, kind: input, shape index: {}]
  %s2 = inlined_call_operand.vmem [shape: f32[1,16], index: 2, kind: input, shape index: {}]
  %s3 = inlined_call_operand.hbm [shape: f32[1,16], index: 3, kind: output, shape index: {}]
  %s4 = sld [smem:[#allocation0]]
  $region22: #{tpu_custom_call.1} parent=0
    _
  %s6 = ssub.s32 1, %s4
  %s7 = scalar_select 0, %s6, %s4
  $region1: #{tpu_custom_call.1} parent=0
    #allocation2 [shape = 'u8[512]{0}', space=vmem, size = 0x400, scoped, tag = 'output window, operand 0, single buffered']
    #allocation3 [shape = 's32[1]{0}', space=sflag, size = 0x4, scoped, tag = 'scoped memory for tpu_custom_call.1']
    %8 = vsyncpa [#allocation3], 0
    // Predicated region
    $region2: #{tpu_custom_call.1} parent=1 // pred_check
      _
    $region3: #{tpu_custom_call.1} parent=1 // pred_check_branch
      %10 = sbr.rel (0) target = $region5
    $region4: #{tpu_custom_call.1} parent=1 // pred_region
      _
    $region5: #{tpu_custom_call.1} parent=1 // pred_fallthru
      _
    // Predicated region
    $region6: #{tpu_custom_call.1} parent=1 // pred_check
      _
    $region7: #{tpu_custom_call.1} parent=1 // pred_check_branch
      %12 = sbr.rel (0) target = $region9
    $region8: #{tpu_custom_call.1} parent=1 // pred_region
      _
    $region9: #{tpu_custom_call.1} parent=1 // pred_fallthru
      _
    // Predicated region
    $region10: #{tpu_custom_call.1} parent=1 // pred_check
      _
    $region11: #{tpu_custom_call.1} parent=1 // pred_check_branch
      %14 = sbr.rel (0) target = $region13
    $region12: #{tpu_custom_call.1} parent=1 // pred_region
      _
    $region13: #{tpu_custom_call.1} parent=1 // pred_fallthru
      _
    %v16 = vld [vmem:[%s0] sm:$0xff]
    %v17 = vld [vmem:[%s0 + $0x8] sm:$0xff]
    %v18 = vpack.c.bf16 %v17, %v16
    %v19 = vld [vmem:[%s1] sm:$0xf]
    %v20 = vld [vmem:[%s1 + $0x4] sm:$0xf]
    %v21 = vld [vmem:[%s1 + $0x8] sm:$0xf]
    %v22 = vld [vmem:[%s1 + $0xc] sm:$0xf]
    %v23 = vld [vmem:[%s2] sm:$0x1]
    %v25 = vlaneseq
    %v26 = vshrl.u32 %v25, 7
    %v27 = vsub.s32 0, %v26
    %v28 = vrot.slane %v23, %v27
    %v34 = vunpack.c.l.b16 %v19
    %v35 = vunpack.c.l.b16 %v20
    %v36 = vunpack.c.l.b16 %v21
    %v37 = vunpack.c.l.b16 %v22
    %v38 = vpack.c.b16 %v35, %v34
    %v39 = vpack.c.b16 %v37, %v36
    %vm42 = vcmask 261120
    %v44 = vsel %vm42, %v18, 0
    %46 = vmatprep.subr.bf16.mxu0 0
    %47 = vmatpush1.bf16.msra.mxu0 %v38
    %48 = vmatprep.subr.bf16.mxu0 0
    %49 = vmatpush1.bf16.msra.mxu0 %v39
    %50 = vmatprep.subr.bf16.mxu0 0
    %51 = vmatpush1.bf16.msra.mxu0 0
    %52 = vmatprep.subr.bf16.mxu0 0
    %53 = vmatpush1.bf16.msra.mxu0 0
    %54 = vmatprep.subr.bf16.mxu0 0
    %55 = vmatpush1.bf16.msra.mxu0 0
    %56 = vmatprep.subr.bf16.mxu0 0
    %57 = vmatpush1.bf16.msra.mxu0 0
    %58 = vmatprep.subr.bf16.mxu0 0
    %59 = vmatpush1.bf16.msra.mxu0 0
    %60 = vmatprep.subr.bf16.mxu0 0
    %61 = vmatpush1.bf16.msra.mxu0 0
    %62 = vmatprep.subr.bf16.mxu0 0
    %63 = vmatpush1.bf16.msra.mxu0 0
    %64 = vmatprep.subr.bf16.mxu0 0
    %65 = vmatpush1.bf16.msra.mxu0 0
    %66 = vmatprep.subr.bf16.mxu0 0
    %67 = vmatpush1.bf16.msra.mxu0 0
    %68 = vmatprep.subr.bf16.mxu0 0
    %69 = vmatpush1.bf16.msra.mxu0 0
    %70 = vmatprep.subr.bf16.mxu0 0
    %71 = vmatpush1.bf16.msra.mxu0 0
    %72 = vmatprep.subr.bf16.mxu0 0
    %73 = vmatpush1.bf16.msra.mxu0 0
    %74 = vmatprep.subr.bf16.mxu0 0
    %75 = vmatpush1.bf16.msra.mxu0 0
    %76 = vmatprep.subr.bf16.mxu0 0
    %77 = vmatpush1.bf16.msra.mxu0 0
    %78 = vmatprep.mubr.bf16.mxu0 0
    %79 = vmatmul.mubr.bf16.gmra.mrb[0].mxu0 %v44
    %v80 = vpop.f32.mrb[0].mxu0
    %v81 = vadd.f32 %v28, %v80
    %v82 = vpop.f32.mrb[0].mxu0
    %v83 = vpop.f32.mrb[0].mxu0
    %v84 = vadd.f32 %v28, %v83
    %v85 = vpop.f32.mrb[0].mxu0
    %86 = vdwg.mxu0
    %vm87 = vcmask 130048
    %v88 = vsel %vm87, %v81, -inf
    %89 = vmax.xlane.f32.xlu0 %v88
    %v90 = vpop.xlane.xlu0 %89
    %v91 = vsel %vm87, %v84, -inf
    %92 = vmax.xlane.f32.xlu0 %v91
    %v93 = vpop.xlane.xlu0 %92
    %v94 = vsub.f32 %v81, %v90
    %v95 = vsub.f32 %v84, %v93
    %v96 = vmul.f32 %v94, 1.442695
    %v97 = vpow.pop %v96
    %v98 = vmul.f32 %v95, 1.442695
    %v99 = vpow.pop %v98
    %v100 = vsel %vm87, %v97, 0.0
    %101 = vadd.xlane.f32.xlu0 %v100
    %v102 = vpop.xlane.xlu0 %101
    %v103 = vsel %vm87, %v99, 0.0
    %104 = vadd.xlane.f32.xlu0 %v103
    %v105 = vpop.xlane.xlu0 %104
    %v106 = vrcp.pop %v102
    %v107 = vmul.f32 %v97, %v106
    %v108 = vrcp.pop %v105
    %v109 = vmul.f32 %v99, %v108
    %112 = vrot.lane.b32.xlu0 %v107, 125
    %v113 = vpop.permute.xlu0 %112
    %114 = vrot.lane.b32.xlu0 %v109, 125
    %v115 = vpop.permute.xlu0 %114
    %118 = vxpose.xlu0.b32.start [1/16] %v113, 128
    %119 = vxpose.xlu0.b32.cont [2/16] %v115, 128
    %120 = vxpose.xlu0.b32.cont [3/16] 0.0, 128
    %121 = vxpose.xlu0.b32.cont [4/16] 0.0, 128
    %122 = vxpose.xlu0.b32.cont [5/16] 0.0, 128
    %123 = vxpose.xlu0.b32.cont [6/16] 0.0, 128
    %124 = vxpose.xlu0.b32.cont [7/16] 0.0, 128
    %125 = vxpose.xlu0.b32.cont [8/16] 0.0, 128
    %126 = vxpose.xlu0.b32.cont [9/16] 0.0, 128
    %127 = vxpose.xlu0.b32.cont [10/16] 0.0, 128
    %128 = vxpose.xlu0.b32.cont [11/16] 0.0, 128
    %129 = vxpose.xlu0.b32.cont [12/16] 0.0, 128
    %130 = vxpose.xlu0.b32.cont [13/16] 0.0, 128
    %131 = vxpose.xlu0.b32.cont [14/16] 0.0, 128
    %132 = vxpose.xlu0.b32.cont [15/16] 0.0, 128
    %133 = vxpose.xlu0.b32.end [16/16] 0.0, 128
    %v134 = vpop.trf.xlu0
    %v135 = vpop.trf.xlu0
    %v136 = vpop.trf.xlu0
    %v137 = vpop.trf.xlu0
    %v138 = vpop.trf.xlu0
    %v139 = vpop.trf.xlu0
    %v140 = vpop.trf.xlu0
    %v141 = vpop.trf.xlu0
    %v142 = vpop.trf.xlu0
    %v143 = vpop.trf.xlu0
    %v144 = vpop.trf.xlu0
    %v145 = vpop.trf.xlu0
    %v146 = vpop.trf.xlu0
    %v147 = vpop.trf.xlu0
    %v148 = vpop.trf.xlu0
    %v149 = vpop.trf.xlu0
    %vm150 = vcmask 122880
    %151 = vst.msk [vmem:[#allocation2] sm:$0x1] %vm150, %v134
    // Predicated region
    $region14: #{tpu_custom_call.1} parent=1 // pred_check
      _
    $region15: #{tpu_custom_call.1} parent=1 // pred_check_branch
      %153 = sbr.rel (0) target = $region17
    $region16: #{tpu_custom_call.1} parent=1 // pred_region
      %s155 = ssub.s32 16, 16
      %156 = vsyncadd [#allocation3], %s155
      %s158 = sshll.u32 [#allocation2], 4
      %s159 = int_to_ptr.vmem [resolvable:$true] %s158
      %161 = dma.vmem_to_hbm [thread:$0]  %s159, 16, %s3, [#allocation3]
    $region17: #{tpu_custom_call.1} parent=1 // pred_fallthru
      _
    // Predicated region
    $region18: #{tpu_custom_call.1} parent=1 // pred_check
      _
    $region19: #{tpu_custom_call.1} parent=1 // pred_check_branch
      %163 = sbr.rel (0) target = $region21
    $region20: #{tpu_custom_call.1} parent=1 // pred_region
      %164 = dma.done [#allocation3], 16
    $region21: #{tpu_custom_call.1} parent=1 // pred_fallthru
      _
    %165 = vsyncpa [#allocation3], 1

// kernel: tpu_custom_call.1
$region0: #{tpu_custom_call.1}
  #allocation0 [shape = 'u32[]', space=smem, size = 0x4, offset = 0x4, fixed_abs, tag = 'smem constant byte address 0x4 - core index']
  #allocation1 [shape = 'u32[144,128]{1,0:T(1,128)}', space=vmem, size = 0x12000, scoped, tag = 'internal scratch']
  %s0 = inlined_call_operand.vmem [shape: f32[16,32], index: 0, kind: input, shape index: {}]
  %s1 = inlined_call_operand.vmem [shape: bf16[32,16], index: 1, kind: input, shape index: {}]
  %s2 = inlined_call_operand.vmem [shape: f32[1,16], index: 2, kind: input, shape index: {}]
  %s3 = inlined_call_operand.hbm [shape: f32[1,16], index: 3, kind: output, shape index: {}]
  %s4 = sld [smem:[#allocation0]]
  $region22: #{tpu_custom_call.1} parent=0
    _
  %s6 = ssub.s32 1, %s4
  %s7 = scalar_select 0, %s6, %s4
  $region1: #{tpu_custom_call.1} parent=0
    #allocation2 [shape = 'u8[512]{0}', space=vmem, size = 0x400, scoped, tag = 'output window, operand 0, single buffered']
    #allocation3 [shape = 's32[1]{0}', space=sflag, size = 0x4, scoped, tag = 'scoped memory for tpu_custom_call.1']
    %8 = vsyncpa [#allocation3], 0
    // Predicated region
    $region2: #{tpu_custom_call.1} parent=1 // pred_check
      _
    $region3: #{tpu_custom_call.1} parent=1 // pred_check_branch
      %10 = sbr.rel (0) target = $region5
    $region4: #{tpu_custom_call.1} parent=1 // pred_region
      _
    $region5: #{tpu_custom_call.1} parent=1 // pred_fallthru
      _
    // Predicated region
    $region6: #{tpu_custom_call.1} parent=1 // pred_check
      _
    $region7: #{tpu_custom_call.1} parent=1 // pred_check_branch
      %12 = sbr.rel (0) target = $region9
    $region8: #{tpu_custom_call.1} parent=1 // pred_region
      _
    $region9: #{tpu_custom_call.1} parent=1 // pred_fallthru
      _
    // Predicated region
    $region10: #{tpu_custom_call.1} parent=1 // pred_check
      _
    $region11: #{tpu_custom_call.1} parent=1 // pred_check_branch
      %14 = sbr.rel (0) target = $region13
    $region12: #{tpu_custom_call.1} parent=1 // pred_region
      _
    $region13: #{tpu_custom_call.1} parent=1 // pred_fallthru
      _
    %v16 = vld [vmem:[%s0] sm:$0xff]
    %v17 = vld [vmem:[%s0 + $0x8] sm:$0xff]
    %v18 = vpack.c.bf16 %v17, %v16
    %v19 = vld [vmem:[%s1] sm:$0xf]
    %v20 = vld [vmem:[%s1 + $0x4] sm:$0xf]
    %v21 = vld [vmem:[%s1 + $0x8] sm:$0xf]
    %v22 = vld [vmem:[%s1 + $0xc] sm:$0xf]
    %v23 = vld [vmem:[%s2] sm:$0x1]
    %v25 = vlaneseq
    %v26 = vshrl.u32 %v25, 7
    %v27 = vsub.s32 0, %v26
    %v28 = vrot.slane %v23, %v27
    %v34 = vunpack.c.l.b16 %v19
    %v35 = vunpack.c.l.b16 %v20
    %v36 = vunpack.c.l.b16 %v21
    %v37 = vunpack.c.l.b16 %v22
    %v38 = vpack.c.b16 %v35, %v34
    %v39 = vpack.c.b16 %v37, %v36
    %vm42 = vcmask 261120
    %v44 = vsel %vm42, %v18, 0
    %46 = vmatprep.subr.bf16.mxu0 0
    %47 = vmatpush1.bf16.msra.mxu0 %v38
    %48 = vmatprep.subr.bf16.mxu0 0
    %49 = vmatpush1.bf16.msra.mxu0 %v39
    %50 = vmatprep.subr.bf16.mxu0 0
    %51 = vmatpush1.bf16.msra.mxu0 0
    %52 = vmatprep.subr.bf16.mxu0 0
    %53 = vmatpush1.bf16.msra.mxu0 0
    %54 = vmatprep.subr.bf16.mxu0 0
    %55 = vmatpush1.bf16.msra.mxu0 0
    %56 = vmatprep.subr.bf16.mxu0 0
    %57 = vmatpush1.bf16.msra.mxu0 0
    %58 = vmatprep.subr.bf16.mxu0 0
    %59 = vmatpush1.bf16.msra.mxu0 0
    %60 = vmatprep.subr.bf16.mxu0 0
    %61 = vmatpush1.bf16.msra.mxu0 0
    %62 = vmatprep.subr.bf16.mxu0 0
    %63 = vmatpush1.bf16.msra.mxu0 0
    %64 = vmatprep.subr.bf16.mxu0 0
    %65 = vmatpush1.bf16.msra.mxu0 0
    %66 = vmatprep.subr.bf16.mxu0 0
    %67 = vmatpush1.bf16.msra.mxu0 0
    %68 = vmatprep.subr.bf16.mxu0 0
    %69 = vmatpush1.bf16.msra.mxu0 0
    %70 = vmatprep.subr.bf16.mxu0 0
    %71 = vmatpush1.bf16.msra.mxu0 0
    %72 = vmatprep.subr.bf16.mxu0 0
    %73 = vmatpush1.bf16.msra.mxu0 0
    %74 = vmatprep.subr.bf16.mxu0 0
    %75 = vmatpush1.bf16.msra.mxu0 0
    %76 = vmatprep.subr.bf16.mxu0 0
    %77 = vmatpush1.bf16.msra.mxu0 0
    %78 = vmatprep.mubr.bf16.mxu0 0
    %79 = vmatmul.mubr.bf16.gmra.mrb[0].mxu0 %v44
    %v80 = vpop.f32.mrb[0].mxu0
    %v81 = vadd.f32 %v28, %v80
    %v82 = vpop.f32.mrb[0].mxu0
    %v83 = vpop.f32.mrb[0].mxu0
    %v84 = vadd.f32 %v28, %v83
    %v85 = vpop.f32.mrb[0].mxu0
    %86 = vdwg.mxu0
    %vm87 = vcmask 130048
    %v88 = vsel %vm87, %v81, -inf
    %89 = vmax.xlane.f32.xlu0 %v88
    %v90 = vpop.xlane.xlu0 %89
    %v91 = vsel %vm87, %v84, -inf
    %92 = vmax.xlane.f32.xlu0 %v91
    %v93 = vpop.xlane.xlu0 %92
    %v94 = vsub.f32 %v81, %v90
    %v95 = vsub.f32 %v84, %v93
    %v96 = vmul.f32 %v94, 1.442695
    %v97 = vpow.pop %v96
    %v98 = vmul.f32 %v95, 1.442695
    %v99 = vpow.pop %v98
    %v100 = vsel %vm87, %v97, 0.0
    %101 = vadd.xlane.f32.xlu0 %v100
    %v102 = vpop.xlane.xlu0 %101
    %v103 = vsel %vm87, %v99, 0.0
    %104 = vadd.xlane.f32.xlu0 %v103
    %v105 = vpop.xlane.xlu0 %104
    %v106 = vrcp.pop %v102
    %v107 = vmul.f32 %v97, %v106
    %v108 = vrcp.pop %v105
    %v109 = vmul.f32 %v99, %v108
    %112 = vrot.lane.b32.xlu0 %v107, 125
    %v113 = vpop.permute.xlu0 %112
    %114 = vrot.lane.b32.xlu0 %v109, 125
    %v115 = vpop.permute.xlu0 %114
    %118 = vxpose.xlu0.b32.start [1/16] %v113, 128
    %119 = vxpose.xlu0.b32.cont [2/16] %v115, 128
    %120 = vxpose.xlu0.b32.cont [3/16] 0.0, 128
    %121 = vxpose.xlu0.b32.cont [4/16] 0.0, 128
    %122 = vxpose.xlu0.b32.cont [5/16] 0.0, 128
    %123 = vxpose.xlu0.b32.cont [6/16] 0.0, 128
    %124 = vxpose.xlu0.b32.cont [7/16] 0.0, 128
    %125 = vxpose.xlu0.b32.cont [8/16] 0.0, 128
    %126 = vxpose.xlu0.b32.cont [9/16] 0.0, 128
    %127 = vxpose.xlu0.b32.cont [10/16] 0.0, 128
    %128 = vxpose.xlu0.b32.cont [11/16] 0.0, 128
    %129 = vxpose.xlu0.b32.cont [12/16] 0.0, 128
    %130 = vxpose.xlu0.b32.cont [13/16] 0.0, 128
    %131 = vxpose.xlu0.b32.cont [14/16] 0.0, 128
    %132 = vxpose.xlu0.b32.cont [15/16] 0.0, 128
    %133 = vxpose.xlu0.b32.end [16/16] 0.0, 128
    %v134 = vpop.trf.xlu0
    %v135 = vpop.trf.xlu0
    %v136 = vpop.trf.xlu0
    %v137 = vpop.trf.xlu0
    %v138 = vpop.trf.xlu0
    %v139 = vpop.trf.xlu0
    %v140 = vpop.trf.xlu0
    %v141 = vpop.trf.xlu0
    %v142 = vpop.trf.xlu0
    %v143 = vpop.trf.xlu0
    %v144 = vpop.trf.xlu0
    %v145 = vpop.trf.xlu0
    %v146 = vpop.trf.xlu0
    %v147 = vpop.trf.xlu0
    %v148 = vpop.trf.xlu0
    %v149 = vpop.trf.xlu0
    %vm150 = vcmask 122880
    %151 = vst.msk [vmem:[#allocation2] sm:$0x1] %vm150, %v134
    // Predicated region
    $region14: #{tpu_custom_call.1} parent=1 // pred_check
      _
    $region15: #{tpu_custom_call.1} parent=1 // pred_check_branch
      %153 = sbr.rel (0) target = $region17
    $region16: #{tpu_custom_call.1} parent=1 // pred_region
      %s155 = ssub.s32 16, 16
      %156 = vsyncadd [#allocation3], %s155
      %s158 = sshll.u32 [#allocation2], 4
      %s159 = int_to_ptr.vmem [resolvable:$true] %s158
      %161 = dma.vmem_to_hbm [thread:$0]  %s159, 16, %s3, [#allocation3]
    $region17: #{tpu_custom_call.1} parent=1 // pred_fallthru
      _
    // Predicated region
    $region18: #{tpu_custom_call.1} parent=1 // pred_check
      _
    $region19: #{tpu_custom_call.1} parent=1 // pred_check_branch
      %163 = sbr.rel (0) target = $region21
    $region20: #{tpu_custom_call.1} parent=1 // pred_region
      %164 = dma.done [#allocation3], 16
    $region21: #{tpu_custom_call.1} parent=1 // pred_fallthru
      _
    %165 = vsyncpa [#allocation3], 1

</llo_original>
